<compile_context>
chip_gen: v7x
topology: tpu7x:2x2x1
jax: 0.10.0
libtpu: 0.0.40
codegen_flags: <defaults>
</compile_context>

<pallas_src>
import functools

import jax
import jax.numpy as jnp
from jax.experimental import pallas as pl
from jax.experimental.pallas import tpu as pltpu


def _round_up(x, m):
    return ((x + m - 1) // m) * m


def _mean_net_kernel(obs_ref, w1_ref, b1_ref, w2_ref, b2_ref, w3_ref, b3_ref,
                     mean_ref):
    """One batch tile: mean = tanh(tanh(x@W1+b1)@W2+b2)@W3 + b3 (n_layers=2)."""
    h = jnp.dot(obs_ref[...], w1_ref[...], preferred_element_type=jnp.float32)
    h = jnp.tanh(h + b1_ref[...])                                 # [bm, size] f32
    h = jnp.dot(h, w2_ref[...], preferred_element_type=jnp.float32)
    h = jnp.tanh(h + b2_ref[...])                                 # [bm, size] f32
    mean = jnp.dot(h, w3_ref[...], preferred_element_type=jnp.float32)
    mean_ref[...] = (mean + b3_ref[...]).astype(mean_ref.dtype)   # [bm, ac_dim]


@functools.partial(jax.jit, static_argnames=("batch_tile", "input_dtype"))
def mlp_policy_forward(obs, params, batch_tile=2048, input_dtype=jnp.float32):
    """MLPPolicySL.forward: returns (mean [B, ac_dim], std [B, ac_dim]).

    obs:    [B, ob_dim] float32
    params: dict with w1,b1,w2,b2,w3,b3 (weights [in,out], biases [1,out]) and
            logstd [ac_dim].
    """
    B, ob_dim = obs.shape
    size = params["w1"].shape[1]
    ac_dim = params["w3"].shape[1]

    # Batch tile: multiple of 8 sublanes, never larger than the rounded batch,
    # and capped so that the grid has >= 2 steps when the batch allows it
    # (lets the "parallel" batch axis shard across v7x's two TensorCores).
    b_ceil8 = _round_up(B, 8)
    bm = _round_up(min(batch_tile, b_ceil8), 8)
    if b_ceil8 > 8 and bm >= b_ceil8:
        bm = _round_up(pl.cdiv(b_ceil8, 2), 8)
    grid = (pl.cdiv(B, bm),)

    # Only the big streams (obs and the first-layer weight it multiplies) take
    # the optional narrow dtype; everything downstream stays f32 on-chip.
    obs_in = obs.astype(input_dtype)
    w1 = params["w1"].astype(input_dtype)
    w2 = params["w2"].astype(jnp.float32)
    w3 = params["w3"].astype(jnp.float32)
    b1 = params["b1"].astype(jnp.float32)
    b2 = params["b2"].astype(jnp.float32)
    b3 = params["b3"].astype(jnp.float32)

    def rep(shape):
        # Small, grid-invariant weight/bias blocks: fully resident, constant index.
        return pl.BlockSpec(shape, lambda i: tuple(0 for _ in shape))

    in_specs = [
        pl.BlockSpec((bm, ob_dim), lambda i: (i, 0)),             # obs tile
        rep((ob_dim, size)), rep((1, size)),                      # w1, b1
        rep((size, size)),   rep((1, size)),                      # w2, b2
        rep((size, ac_dim)), rep((1, ac_dim)),                    # w3, b3
    ]
    out_specs = pl.BlockSpec((bm, ac_dim), lambda i: (i, 0))      # compact output
    out_shape = jax.ShapeDtypeStruct((B, ac_dim), jnp.float32)

    in_itemsize = jnp.dtype(input_dtype).itemsize
    weight_bytes = (ob_dim * size * in_itemsize
                    + (size * size + size * ac_dim + 2 * size + ac_dim) * 4)
    # Double-buffered obs/out blocks + resident weights + hidden-act temporaries,
    # with 2x headroom; a few MiB instead of the whole v7x per-core VMEM.
    block_bytes = (2 * bm * ob_dim * in_itemsize
                   + 2 * bm * ac_dim * 4
                   + 2 * weight_bytes
                   + 4 * bm * size * 4)
    vmem_limit = int(min(96 * 1024 * 1024, max(8 * 1024 * 1024, 2 * block_bytes)))

    weight_elems = ob_dim * size + size * size + size * ac_dim
    cost = pl.CostEstimate(
        flops=2 * B * weight_elems,
        transcendentals=2 * B * size,                             # two tanh layers
        bytes_accessed=(B * ob_dim * in_itemsize                  # obs in
                        + weight_bytes                            # weights/biases in
                        + B * ac_dim * 4),                        # mean out
    )

    mean = pl.pallas_call(
        _mean_net_kernel,
        out_shape=out_shape,
        grid_spec=pltpu.PrefetchScalarGridSpec(
            num_scalar_prefetch=0,
            grid=grid,
            in_specs=in_specs,
            out_specs=out_specs,
        ),
        compiler_params=pltpu.CompilerParams(
            dimension_semantics=("parallel",),
            vmem_limit_bytes=vmem_limit,
        ),
        cost_estimate=cost,
    )(obs_in, w1, b1, w2, b2, w3, b3)

    # std is observation-independent: exp once in the wrapper and broadcast
    # (matches torch.distributions.Normal(mean, exp(logstd)) broadcasting).
    std = jnp.broadcast_to(
        jnp.exp(params["logstd"].astype(jnp.float32))[None, :], mean.shape)
    return mean, std


def init_params(key, ob_dim, ac_dim, size):
    """Mimics nn.Linear default init: U(-1/sqrt(fan_in), +1/sqrt(fan_in))."""
    keys = jax.random.split(key, 6)

    def linear(kw, kb, fan_in, fan_out):
        bound = 1.0 / jnp.sqrt(jnp.float32(fan_in))
        w = jax.random.uniform(kw, (fan_in, fan_out), jnp.float32, -bound, bound)
        b = jax.random.uniform(kb, (1, fan_out), jnp.float32, -bound, bound)
        return w, b

    w1, b1 = linear(keys[0], keys[1], ob_dim, size)
    w2, b2 = linear(keys[2], keys[3], size, size)
    w3, b3 = linear(keys[4], keys[5], size, ac_dim)
    logstd = jnp.zeros((ac_dim,), jnp.float32)  # nn.Parameter(torch.zeros(ac_dim))
    return dict(w1=w1, b1=b1, w2=w2, b2=b2, w3=w3, b3=b3, logstd=logstd)


def reference_forward(obs, params):
    h = jnp.tanh(obs @ params["w1"] + params["b1"])
    h = jnp.tanh(h @ params["w2"] + params["b2"])
    mean = h @ params["w3"] + params["b3"]
    std = jnp.broadcast_to(jnp.exp(params["logstd"])[None, :], mean.shape)
    return mean, std


if __name__ == "__main__":
    # Small shapes consistent with the policy: ob_dim=16, ac_dim=4,
    # n_layers=2 hidden layers of size=32.
    B, ob_dim, ac_dim, size = 8, 16, 4, 32

    key = jax.random.PRNGKey(0)
    k_obs, k_params, k_obs2 = jax.random.split(key, 3)
    obs = jax.random.normal(k_obs, (B, ob_dim), jnp.float32)
    params = init_params(k_params, ob_dim, ac_dim, size)

    # f32 path, single tile (tight tolerance).
    mean, std = mlp_policy_forward(obs, params)
    jax.block_until_ready((mean, std))
    ref_mean, ref_std = reference_forward(obs, params)
    assert mean.shape == (B, ac_dim) and std.shape == (B, ac_dim)
    assert jnp.allclose(mean, ref_mean, atol=1e-5, rtol=1e-5)
    assert jnp.allclose(std, ref_std, atol=1e-6, rtol=1e-6)

    # Ragged batch + multi-step grid with NO wrapper-side padding of obs.
    B2 = 300
    obs2 = jax.random.normal(k_obs2, (B2, ob_dim), jnp.float32)
    mean2, std2 = mlp_policy_forward(obs2, params, batch_tile=128)
    jax.block_until_ready((mean2, std2))
    ref_mean2, ref_std2 = reference_forward(obs2, params)
    assert mean2.shape == (B2, ac_dim)
    assert jnp.allclose(mean2, ref_mean2, atol=1e-5, rtol=1e-5)
    assert jnp.allclose(std2, ref_std2, atol=1e-6, rtol=1e-6)

    # Default (large) tile: exercises the >=2-grid-steps cap on a ragged batch.
    mean3, _ = mlp_policy_forward(obs2, params)
    jax.block_until_ready(mean3)
    assert jnp.allclose(mean3, ref_mean2, atol=1e-5, rtol=1e-5)

    # Optional bf16 obs/W1 stream (bandwidth path for v6e/v7x); f32 accumulation
    # and f32 layers 2/3, so only one bf16 rounding of obs/W1.
    mean_bf, _ = mlp_policy_forward(obs2, params, input_dtype=jnp.bfloat16)
    jax.block_until_ready(mean_bf)
    assert jnp.allclose(mean_bf, ref_mean2, atol=5e-2, rtol=5e-2)

    print("KERNEL_OK")
</pallas_src>

<mosaic_0001>
module attributes {stable_mosaic.version = 11 : i64} {
  func.func @_mean_net_kernel(%arg0: i32, %arg1: memref<8x16xf32, #tpu.memory_space<vmem>>, %arg2: memref<16x32xf32, #tpu.memory_space<vmem>>, %arg3: memref<1x32xf32, #tpu.memory_space<vmem>>, %arg4: memref<32x32xf32, #tpu.memory_space<vmem>>, %arg5: memref<1x32xf32, #tpu.memory_space<vmem>>, %arg6: memref<32x4xf32, #tpu.memory_space<vmem>>, %arg7: memref<1x4xf32, #tpu.memory_space<vmem>>, %arg8: memref<8x4xf32, #tpu.memory_space<vmem>>) attributes {dimension_semantics = [#tpu.dimension_semantics<parallel>], iteration_bounds = array<i64: 1>, scalar_prefetch = 0 : i64, scratch_operands = 0 : i64, tpu.core_type = #tpu.core_type<tc>, window_params = [{transform_indices = @transform_0, window_bounds = array<i64: 8, 16>}, {pipeline_mode = #tpu.pipeline_mode<synchronous>, transform_indices = @transform_1, window_bounds = array<i64: 16, 32>}, {pipeline_mode = #tpu.pipeline_mode<synchronous>, transform_indices = @transform_2, window_bounds = array<i64: 1, 32>}, {pipeline_mode = #tpu.pipeline_mode<synchronous>, transform_indices = @transform_3, window_bounds = array<i64: 32, 32>}, {pipeline_mode = #tpu.pipeline_mode<synchronous>, transform_indices = @transform_4, window_bounds = array<i64: 1, 32>}, {pipeline_mode = #tpu.pipeline_mode<synchronous>, transform_indices = @transform_5, window_bounds = array<i64: 32, 4>}, {pipeline_mode = #tpu.pipeline_mode<synchronous>, transform_indices = @transform_6, window_bounds = array<i64: 1, 4>}, {transform_indices = @transform_7, window_bounds = array<i64: 8, 4>}]} {
    %c0 = arith.constant 0 : index
    %c0_0 = arith.constant 0 : index
    %0 = vector.load %arg1[%c0, %c0_0] : memref<8x16xf32, #tpu.memory_space<vmem>>, vector<8x16xf32>
    %c0_1 = arith.constant 0 : index
    %c0_2 = arith.constant 0 : index
    %1 = vector.load %arg2[%c0_1, %c0_2] : memref<16x32xf32, #tpu.memory_space<vmem>>, vector<16x32xf32>
    %cst = arith.constant dense<0.000000e+00> : vector<8x32xf32>
    %2 = tpu.matmul %0, %1, %cst {dimension_numbers = #tpu.dot_dimension_numbers<[1], [0], [0], [1], [0, 0, 1, 1], [], []>} : vector<8x16xf32>, vector<16x32xf32>, vector<8x32xf32> -> vector<8x32xf32>
    %c0_3 = arith.constant 0 : index
    %c0_4 = arith.constant 0 : index
    %3 = vector.load %arg3[%c0_3, %c0_4] : memref<1x32xf32, #tpu.memory_space<vmem>>, vector<1x32xf32>
    %4 = vector.broadcast %3 : vector<1x32xf32> to vector<8x32xf32>
    %5 = arith.addf %2, %4 : vector<8x32xf32>
    %6 = math.tanh %5 : vector<8x32xf32>
    %c0_5 = arith.constant 0 : index
    %c0_6 = arith.constant 0 : index
    %7 = vector.load %arg4[%c0_5, %c0_6] : memref<32x32xf32, #tpu.memory_space<vmem>>, vector<32x32xf32>
    %cst_7 = arith.constant dense<0.000000e+00> : vector<8x32xf32>
    %8 = tpu.matmul %6, %7, %cst_7 {dimension_numbers = #tpu.dot_dimension_numbers<[1], [0], [0], [1], [0, 0, 1, 1], [], []>} : vector<8x32xf32>, vector<32x32xf32>, vector<8x32xf32> -> vector<8x32xf32>
    %c0_8 = arith.constant 0 : index
    %c0_9 = arith.constant 0 : index
    %9 = vector.load %arg5[%c0_8, %c0_9] : memref<1x32xf32, #tpu.memory_space<vmem>>, vector<1x32xf32>
    %10 = vector.broadcast %9 : vector<1x32xf32> to vector<8x32xf32>
    %11 = arith.addf %8, %10 : vector<8x32xf32>
    %12 = math.tanh %11 : vector<8x32xf32>
    %c0_10 = arith.constant 0 : index
    %c0_11 = arith.constant 0 : index
    %13 = vector.load %arg6[%c0_10, %c0_11] : memref<32x4xf32, #tpu.memory_space<vmem>>, vector<32x4xf32>
    %cst_12 = arith.constant dense<0.000000e+00> : vector<8x4xf32>
    %14 = tpu.matmul %12, %13, %cst_12 {dimension_numbers = #tpu.dot_dimension_numbers<[1], [0], [0], [1], [0, 0, 1, 1], [], []>} : vector<8x32xf32>, vector<32x4xf32>, vector<8x4xf32> -> vector<8x4xf32>
    %c0_13 = arith.constant 0 : index
    %c0_14 = arith.constant 0 : index
    %15 = vector.load %arg7[%c0_13, %c0_14] : memref<1x4xf32, #tpu.memory_space<vmem>>, vector<1x4xf32>
    %16 = vector.broadcast %15 : vector<1x4xf32> to vector<8x4xf32>
    %17 = arith.addf %14, %16 : vector<8x4xf32>
    %c0_15 = arith.constant 0 : index
    %c0_16 = arith.constant 0 : index
    %18 = vector.load %arg8[%c0_15, %c0_16] : memref<8x4xf32, #tpu.memory_space<vmem>>, vector<8x4xf32>
    tpu.vector_store %arg8[%c0_15, %c0_16], %17 {strides = array<i32>} : memref<8x4xf32, #tpu.memory_space<vmem>>, vector<8x4xf32>,
    return
  }
  func.func @transform_0(%arg0: i32) -> (i32, i32) {
    %c0_i32 = arith.constant 0 : i32
    %c0_i32_0 = arith.constant 0 : i32
    return %arg0, %c0_i32 : i32, i32
  }
  func.func @transform_1(%arg0: i32) -> (i32, i32) {
    %c0_i32 = arith.constant 0 : i32
    %c0_i32_0 = arith.constant 0 : i32
    %c0_i32_1 = arith.constant 0 : i32
    return %c0_i32, %c0_i32_0 : i32, i32
  }
  func.func @transform_2(%arg0: i32) -> (i32, i32) {
    %c0_i32 = arith.constant 0 : i32
    %c0_i32_0 = arith.constant 0 : i32
    %c0_i32_1 = arith.constant 0 : i32
    return %c0_i32, %c0_i32_0 : i32, i32
  }
  func.func @transform_3(%arg0: i32) -> (i32, i32) {
    %c0_i32 = arith.constant 0 : i32
    %c0_i32_0 = arith.constant 0 : i32
    %c0_i32_1 = arith.constant 0 : i32
    return %c0_i32, %c0_i32_0 : i32, i32
  }
  func.func @transform_4(%arg0: i32) -> (i32, i32) {
    %c0_i32 = arith.constant 0 : i32
    %c0_i32_0 = arith.constant 0 : i32
    %c0_i32_1 = arith.constant 0 : i32
    return %c0_i32, %c0_i32_0 : i32, i32
  }
  func.func @transform_5(%arg0: i32) -> (i32, i32) {
    %c0_i32 = arith.constant 0 : i32
    %c0_i32_0 = arith.constant 0 : i32
    %c0_i32_1 = arith.constant 0 : i32
    return %c0_i32, %c0_i32_0 : i32, i32
  }
  func.func @transform_6(%arg0: i32) -> (i32, i32) {
    %c0_i32 = arith.constant 0 : i32
    %c0_i32_0 = arith.constant 0 : i32
    %c0_i32_1 = arith.constant 0 : i32
    return %c0_i32, %c0_i32_0 : i32, i32
  }
  func.func @transform_7(%arg0: i32) -> (i32, i32) {
    %c0_i32 = arith.constant 0 : i32
    %c0_i32_0 = arith.constant 0 : i32
    return %arg0, %c0_i32 : i32, i32
  }
}

</mosaic_0001>

<llo_original>
// kernel: mlp_policy_forward.1
$region0: #{mlp_policy_forward.1}
  #allocation0 [shape = 'u32[]', space=smem, size = 0x4, offset = 0x4, fixed_abs, tag = 'smem constant byte address 0x4 - core index']
  #allocation1 [shape = 'u32[144,128]{1,0:T(1,128)}', space=vmem, size = 0x12000, scoped, tag = 'internal scratch']
  %s0 = inlined_call_operand.vmem [shape: f32[8,16], index: 0, kind: input, shape index: {}]
  %s1 = inlined_call_operand.hbm [shape: f32[16,32], index: 1, kind: input, shape index: {}]
  %s2 = inlined_call_operand.vmem [shape: f32[1,32], index: 2, kind: input, shape index: {}]
  %s3 = inlined_call_operand.vmem [shape: f32[32,32], index: 3, kind: input, shape index: {}]
  %s4 = inlined_call_operand.vmem [shape: f32[1,32], index: 4, kind: input, shape index: {}]
  %s5 = inlined_call_operand.vmem [shape: f32[32,4], index: 5, kind: input, shape index: {}]
  %s6 = inlined_call_operand.vmem [shape: f32[1,4], index: 6, kind: input, shape index: {}]
  %s7 = inlined_call_operand.vmem [shape: f32[8,4], index: 7, kind: output, shape index: {}]
  %s8 = sld [smem:[#allocation0]]
  $region42: #{mlp_policy_forward.1} parent=0
    _
  %s10 = ssub.s32 1, %s8
  %s11 = scalar_select 0, %s10, %s8
  $region1: #{mlp_policy_forward.1} parent=0
    #allocation2 [shape = 'u8[8192]{0}', space=vmem, size = 0x2000, scoped, tag = 'input window, operand 1, single buffered']
    #allocation3 [shape = 's32[1]{0}', space=sflag, size = 0x4, scoped, tag = 'scoped memory for mlp_policy_forward.1']
    %12 = vsyncpa [#allocation3], 0
    // Predicated region
    $region2: #{mlp_policy_forward.1} parent=1 // pred_check
      _
    $region3: #{mlp_policy_forward.1} parent=1 // pred_check_branch
      %14 = sbr.rel (0) target = $region5
    $region4: #{mlp_policy_forward.1} parent=1 // pred_region
      _
    $region5: #{mlp_policy_forward.1} parent=1 // pred_fallthru
      _
    // Predicated region
    $region6: #{mlp_policy_forward.1} parent=1 // pred_check
      _
    $region7: #{mlp_policy_forward.1} parent=1 // pred_check_branch
      %16 = sbr.rel (0) target = $region9
    $region8: #{mlp_policy_forward.1} parent=1 // pred_region
      %s18 = ssub.s32 256, 256
      %19 = vsyncadd [#allocation3], %s18
      %s20 = sshll.u32 [#allocation2], 4
      %s21 = int_to_ptr.vmem [resolvable:$true] %s20
      %26 = dma.hbm_to_vmem [thread:$0]  %s1, 256, %s21, [#allocation3], 128, 128, 8
    $region9: #{mlp_policy_forward.1} parent=1 // pred_fallthru
      _
    // Predicated region
    $region10: #{mlp_policy_forward.1} parent=1 // pred_check
      _
    $region11: #{mlp_policy_forward.1} parent=1 // pred_check_branch
      %28 = sbr.rel (0) target = $region13
    $region12: #{mlp_policy_forward.1} parent=1 // pred_region
      _
    $region13: #{mlp_policy_forward.1} parent=1 // pred_fallthru
      _
    // Predicated region
    $region14: #{mlp_policy_forward.1} parent=1 // pred_check
      _
    $region15: #{mlp_policy_forward.1} parent=1 // pred_check_branch
      %30 = sbr.rel (0) target = $region17
    $region16: #{mlp_policy_forward.1} parent=1 // pred_region
      _
    $region17: #{mlp_policy_forward.1} parent=1 // pred_fallthru
      _
    // Predicated region
    $region18: #{mlp_policy_forward.1} parent=1 // pred_check
      _
    $region19: #{mlp_policy_forward.1} parent=1 // pred_check_branch
      %32 = sbr.rel (0) target = $region21
    $region20: #{mlp_policy_forward.1} parent=1 // pred_region
      _
    $region21: #{mlp_policy_forward.1} parent=1 // pred_fallthru
      _
    // Predicated region
    $region22: #{mlp_policy_forward.1} parent=1 // pred_check
      _
    $region23: #{mlp_policy_forward.1} parent=1 // pred_check_branch
      %34 = sbr.rel (0) target = $region25
    $region24: #{mlp_policy_forward.1} parent=1 // pred_region
      _
    $region25: #{mlp_policy_forward.1} parent=1 // pred_fallthru
      _
    // Predicated region
    $region26: #{mlp_policy_forward.1} parent=1 // pred_check
      _
    $region27: #{mlp_policy_forward.1} parent=1 // pred_check_branch
      %36 = sbr.rel (0) target = $region29
    $region28: #{mlp_policy_forward.1} parent=1 // pred_region
      _
    $region29: #{mlp_policy_forward.1} parent=1 // pred_fallthru
      _
    // Predicated region
    $region30: #{mlp_policy_forward.1} parent=1 // pred_check
      _
    $region31: #{mlp_policy_forward.1} parent=1 // pred_check_branch
      %38 = sbr.rel (0) target = $region33
    $region32: #{mlp_policy_forward.1} parent=1 // pred_region
      %39 = dma.done [#allocation3], 256
    $region33: #{mlp_policy_forward.1} parent=1 // pred_fallthru
      _
    %v40 = vld [vmem:[%s0] sm:$0xff]
    %v41 = vld [vmem:[#allocation2] sm:$0xff]
    %v42 = vld [vmem:[#allocation2 + $0x8] sm:$0xff]
    %v43 = vld [vmem:[%s2] sm:$0x1]
    %v45 = vlaneseq
    %v46 = vshrl.u32 %v45, 7
    %v47 = vsub.s32 0, %v46
    %v48 = vrot.slane %v43, %v47
    %vm50 = vcmask 130048
    %v52 = vsel %vm50, %v40, 0
    %54 = vmatprep.subr.mxu0 0.0
    %55 = vmatpush1.msra.mxu0 %v41
    %56 = vmatprep.subr.mxu0 0.0
    %57 = vmatpush1.msra.mxu0 %v42
    %58 = vmatprep.subr.mxu0 0.0
    %59 = vmatpush1.msra.mxu0 0.0
    %60 = vmatprep.subr.mxu0 0.0
    %61 = vmatpush1.msra.mxu0 0.0
    %62 = vmatprep.subr.mxu0 0.0
    %63 = vmatpush1.msra.mxu0 0.0
    %64 = vmatprep.subr.mxu0 0.0
    %65 = vmatpush1.msra.mxu0 0.0
    %66 = vmatprep.subr.mxu0 0.0
    %67 = vmatpush1.msra.mxu0 0.0
    %68 = vmatprep.subr.mxu0 0.0
    %69 = vmatpush1.msra.mxu0 0.0
    %70 = vmatprep.subr.mxu0 0.0
    %71 = vmatpush1.msra.mxu0 0.0
    %72 = vmatprep.subr.mxu0 0.0
    %73 = vmatpush1.msra.mxu0 0.0
    %74 = vmatprep.subr.mxu0 0.0
    %75 = vmatpush1.msra.mxu0 0.0
    %76 = vmatprep.subr.mxu0 0.0
    %77 = vmatpush1.msra.mxu0 0.0
    %78 = vmatprep.subr.mxu0 0.0
    %79 = vmatpush1.msra.mxu0 0.0
    %80 = vmatprep.subr.mxu0 0.0
    %81 = vmatpush1.msra.mxu0 0.0
    %82 = vmatprep.subr.mxu0 0.0
    %83 = vmatpush1.msra.mxu0 0.0
    %84 = vmatprep.subr.mxu0 0.0
    %85 = vmatpush1.msra.mxu0 0.0
    %86 = vmatprep.subr.mxu0 0.0
    %87 = vmatpush1.msra.mxu0 0.0
    %88 = vmatprep.subr.mxu0 0.0
    %89 = vmatpush1.msra.mxu0 0.0
    %90 = vmatprep.subr.mxu0 0.0
    %91 = vmatpush1.msra.mxu0 0.0
    %92 = vmatprep.subr.mxu0 0.0
    %93 = vmatpush1.msra.mxu0 0.0
    %94 = vmatprep.subr.mxu0 0.0
    %95 = vmatpush1.msra.mxu0 0.0
    %96 = vmatprep.subr.mxu0 0.0
    %97 = vmatpush1.msra.mxu0 0.0
    %98 = vmatprep.subr.mxu0 0.0
    %99 = vmatpush1.msra.mxu0 0.0
    %100 = vmatprep.subr.mxu0 0.0
    %101 = vmatpush1.msra.mxu0 0.0
    %102 = vmatprep.subr.mxu0 0.0
    %103 = vmatpush1.msra.mxu0 0.0
    %104 = vmatprep.subr.mxu0 0.0
    %105 = vmatpush1.msra.mxu0 0.0
    %106 = vmatprep.subr.mxu0 0.0
    %107 = vmatpush1.msra.mxu0 0.0
    %108 = vmatprep.subr.mxu0 0.0
    %109 = vmatpush1.msra.mxu0 0.0
    %110 = vmatprep.subr.mxu0 0.0
    %111 = vmatpush1.msra.mxu0 0.0
    %112 = vmatprep.subr.mxu0 0.0
    %113 = vmatpush1.msra.mxu0 0.0
    %114 = vmatprep.subr.mxu0 0.0
    %115 = vmatpush1.msra.mxu0 0.0
    %116 = vmatprep.subr.mxu0 0.0
    %117 = vmatpush1.msra.mxu0 0.0
    %118 = vmatprep.mubr.f32.mxu0 0.0
    %119 = vmatmul.mubr.f32.gmra.mrb[0].mxu0 %v52
    %v120 = vpop.f32.mrb[0].mxu0
    %v121 = vadd.f32 %v48, %v120
    %v122 = vpop.f32.mrb[0].mxu0
    %123 = vdwg.mxu0
    %v124 = vtanh.pop %v121
    %v125 = vld [vmem:[%s3] sm:$0xff]
    %v126 = vld [vmem:[%s3 + $0x8] sm:$0xff]
    %v127 = vld [vmem:[%s3 + $0x10] sm:$0xff]
    %v128 = vld [vmem:[%s3 + $0x18] sm:$0xff]
    %v129 = vld [vmem:[%s4] sm:$0x1]
    %v131 = vlaneseq
    %v132 = vshrl.u32 %v131, 7
    %v133 = vsub.s32 0, %v132
    %v134 = vrot.slane %v129, %v133
    %vm136 = vcmask 261120
    %v138 = vsel %vm136, %v124, 0
    %140 = vmatprep.subr.mxu0 0.0
    %141 = vmatpush1.msra.mxu0 %v125
    %142 = vmatprep.subr.mxu0 0.0
    %143 = vmatpush1.msra.mxu0 %v126
    %144 = vmatprep.subr.mxu0 0.0
    %145 = vmatpush1.msra.mxu0 %v127
    %146 = vmatprep.subr.mxu0 0.0
    %147 = vmatpush1.msra.mxu0 %v128
    %148 = vmatprep.subr.mxu0 0.0
    %149 = vmatpush1.msra.mxu0 0.0
    %150 = vmatprep.subr.mxu0 0.0
    %151 = vmatpush1.msra.mxu0 0.0
    %152 = vmatprep.subr.mxu0 0.0
    %153 = vmatpush1.msra.mxu0 0.0
    %154 = vmatprep.subr.mxu0 0.0
    %155 = vmatpush1.msra.mxu0 0.0
    %156 = vmatprep.subr.mxu0 0.0
    %157 = vmatpush1.msra.mxu0 0.0
    %158 = vmatprep.subr.mxu0 0.0
    %159 = vmatpush1.msra.mxu0 0.0
    %160 = vmatprep.subr.mxu0 0.0
    %161 = vmatpush1.msra.mxu0 0.0
    %162 = vmatprep.subr.mxu0 0.0
    %163 = vmatpush1.msra.mxu0 0.0
    %164 = vmatprep.subr.mxu0 0.0
    %165 = vmatpush1.msra.mxu0 0.0
    %166 = vmatprep.subr.mxu0 0.0
    %167 = vmatpush1.msra.mxu0 0.0
    %168 = vmatprep.subr.mxu0 0.0
    %169 = vmatpush1.msra.mxu0 0.0
    %170 = vmatprep.subr.mxu0 0.0
    %171 = vmatpush1.msra.mxu0 0.0
    %172 = vmatprep.subr.mxu0 0.0
    %173 = vmatpush1.msra.mxu0 0.0
    %174 = vmatprep.subr.mxu0 0.0
    %175 = vmatpush1.msra.mxu0 0.0
    %176 = vmatprep.subr.mxu0 0.0
    %177 = vmatpush1.msra.mxu0 0.0
    %178 = vmatprep.subr.mxu0 0.0
    %179 = vmatpush1.msra.mxu0 0.0
    %180 = vmatprep.subr.mxu0 0.0
    %181 = vmatpush1.msra.mxu0 0.0
    %182 = vmatprep.subr.mxu0 0.0
    %183 = vmatpush1.msra.mxu0 0.0
    %184 = vmatprep.subr.mxu0 0.0
    %185 = vmatpush1.msra.mxu0 0.0
    %186 = vmatprep.subr.mxu0 0.0
    %187 = vmatpush1.msra.mxu0 0.0
    %188 = vmatprep.subr.mxu0 0.0
    %189 = vmatpush1.msra.mxu0 0.0
    %190 = vmatprep.subr.mxu0 0.0
    %191 = vmatpush1.msra.mxu0 0.0
    %192 = vmatprep.subr.mxu0 0.0
    %193 = vmatpush1.msra.mxu0 0.0
    %194 = vmatprep.subr.mxu0 0.0
    %195 = vmatpush1.msra.mxu0 0.0
    %196 = vmatprep.subr.mxu0 0.0
    %197 = vmatpush1.msra.mxu0 0.0
    %198 = vmatprep.subr.mxu0 0.0
    %199 = vmatpush1.msra.mxu0 0.0
    %200 = vmatprep.subr.mxu0 0.0
    %201 = vmatpush1.msra.mxu0 0.0
    %202 = vmatprep.subr.mxu0 0.0
    %203 = vmatpush1.msra.mxu0 0.0
    %204 = vmatprep.mubr.f32.mxu0 0.0
    %205 = vmatmul.mubr.f32.gmra.mrb[0].mxu0 %v138
    %v206 = vpop.f32.mrb[0].mxu0
    %v207 = vadd.f32 %v134, %v206
    %v208 = vpop.f32.mrb[0].mxu0
    %209 = vdwg.mxu0
    %v210 = vtanh.pop %v207
    %v211 = vld [vmem:[%s5] sm:$0xff]
    %v212 = vld [vmem:[%s5 + $0x8] sm:$0xff]
    %v213 = vld [vmem:[%s5 + $0x10] sm:$0xff]
    %v214 = vld [vmem:[%s5 + $0x18] sm:$0xff]
    %v215 = vld [vmem:[%s6] sm:$0x1]
    %v217 = vlaneseq
    %v218 = vshrl.u32 %v217, 7
    %v219 = vsub.s32 0, %v218
    %v220 = vrot.slane %v215, %v219
    %v223 = vsel %vm136, %v210, 0
    %225 = vmatprep.subr.mxu0 0.0
    %226 = vmatpush1.msra.mxu0 %v211
    %227 = vmatprep.subr.mxu0 0.0
    %228 = vmatpush1.msra.mxu0 %v212
    %229 = vmatprep.subr.mxu0 0.0
    %230 = vmatpush1.msra.mxu0 %v213
    %231 = vmatprep.subr.mxu0 0.0
    %232 = vmatpush1.msra.mxu0 %v214
    %233 = vmatprep.subr.mxu0 0.0
    %234 = vmatpush1.msra.mxu0 0.0
    %235 = vmatprep.subr.mxu0 0.0
    %236 = vmatpush1.msra.mxu0 0.0
    %237 = vmatprep.subr.mxu0 0.0
    %238 = vmatpush1.msra.mxu0 0.0
    %239 = vmatprep.subr.mxu0 0.0
    %240 = vmatpush1.msra.mxu0 0.0
    %241 = vmatprep.subr.mxu0 0.0
    %242 = vmatpush1.msra.mxu0 0.0
    %243 = vmatprep.subr.mxu0 0.0
    %244 = vmatpush1.msra.mxu0 0.0
    %245 = vmatprep.subr.mxu0 0.0
    %246 = vmatpush1.msra.mxu0 0.0
    %247 = vmatprep.subr.mxu0 0.0
    %248 = vmatpush1.msra.mxu0 0.0
    %249 = vmatprep.subr.mxu0 0.0
    %250 = vmatpush1.msra.mxu0 0.0
    %251 = vmatprep.subr.mxu0 0.0
    %252 = vmatpush1.msra.mxu0 0.0
    %253 = vmatprep.subr.mxu0 0.0
    %254 = vmatpush1.msra.mxu0 0.0
    %255 = vmatprep.subr.mxu0 0.0
    %256 = vmatpush1.msra.mxu0 0.0
    %257 = vmatprep.subr.mxu0 0.0
    %258 = vmatpush1.msra.mxu0 0.0
    %259 = vmatprep.subr.mxu0 0.0
    %260 = vmatpush1.msra.mxu0 0.0
    %261 = vmatprep.subr.mxu0 0.0
    %262 = vmatpush1.msra.mxu0 0.0
    %263 = vmatprep.subr.mxu0 0.0
    %264 = vmatpush1.msra.mxu0 0.0
    %265 = vmatprep.subr.mxu0 0.0
    %266 = vmatpush1.msra.mxu0 0.0
    %267 = vmatprep.subr.mxu0 0.0
    %268 = vmatpush1.msra.mxu0 0.0
    %269 = vmatprep.subr.mxu0 0.0
    %270 = vmatpush1.msra.mxu0 0.0
    %271 = vmatprep.subr.mxu0 0.0
    %272 = vmatpush1.msra.mxu0 0.0
    %273 = vmatprep.subr.mxu0 0.0
    %274 = vmatpush1.msra.mxu0 0.0
    %275 = vmatprep.subr.mxu0 0.0
    %276 = vmatpush1.msra.mxu0 0.0
    %277 = vmatprep.subr.mxu0 0.0
    %278 = vmatpush1.msra.mxu0 0.0
    %279 = vmatprep.subr.mxu0 0.0
    %280 = vmatpush1.msra.mxu0 0.0
    %281 = vmatprep.subr.mxu0 0.0
    %282 = vmatpush1.msra.mxu0 0.0
    %283 = vmatprep.subr.mxu0 0.0
    %284 = vmatpush1.msra.mxu0 0.0
    %285 = vmatprep.subr.mxu0 0.0
    %286 = vmatpush1.msra.mxu0 0.0
    %287 = vmatprep.subr.mxu0 0.0
    %288 = vmatpush1.msra.mxu0 0.0
    %289 = vmatprep.mubr.f32.mxu0 0.0
    %290 = vmatmul.mubr.f32.gmra.mrb[0].mxu0 %v223
    %v291 = vpop.f32.mrb[0].mxu0
    %v292 = vadd.f32 %v220, %v291
    %v293 = vpop.f32.mrb[0].mxu0
    %294 = vdwg.mxu0
    %vm295 = vcmask 31744
    %296 = vst.msk [vmem:[%s7] sm:$0xff] %vm295, %v292
    // Predicated region
    $region34: #{mlp_policy_forward.1} parent=1 // pred_check
      _
    $region35: #{mlp_policy_forward.1} parent=1 // pred_check_branch
      %298 = sbr.rel (0) target = $region37
    $region36: #{mlp_policy_forward.1} parent=1 // pred_region
      _
    $region37: #{mlp_policy_forward.1} parent=1 // pred_fallthru
      _
    // Predicated region
    $region38: #{mlp_policy_forward.1} parent=1 // pred_check
      _
    $region39: #{mlp_policy_forward.1} parent=1 // pred_check_branch
      %300 = sbr.rel (0) target = $region41
    $region40: #{mlp_policy_forward.1} parent=1 // pred_region
      _
    $region41: #{mlp_policy_forward.1} parent=1 // pred_fallthru
      _
    %301 = vsyncpa [#allocation3], 1

</llo_original>
